<compile_context>
chip_gen: v7x
topology: tpu7x:2x2x1
jax: 0.10.0
libtpu: 0.0.40
codegen_flags: <defaults>
</compile_context>

<pallas_src>
import jax
import jax.numpy as jnp
from jax.experimental import pallas as pl
from jax.experimental.pallas import tpu as pltpu

B, SEQ, HIDDEN, EMB = 2, 8, 128, 64   # module uses SEQ=256, HIDDEN=768, EMB=200
BETA = 0.001
LN_EPS = 1e-5
MATMUL_DTYPE = jnp.bfloat16           # MXU-native operands, f32 accumulation


def fused_gating_ln_kernel(emb_ref, pw1_ref, pw2_ref, w1e_ref, gamma_ref, beta_ref,
                           out_ref, h_sc, x_sc, sse_sc, ssh_sc, alfa_sc):
    phase = pl.program_id(0)          # 0 = gating + norm accumulation, 1 = alfa + LN
    b = pl.program_id(1)
    s = pl.program_id(2)
    idx = b * pl.num_programs(2) + s  # flat tile index into the VMEM stashes

    @pl.when(phase == 0)
    def _gating():
        @pl.when((b == 0) & (s == 0))
        def _():
            sse_sc[...] = jnp.zeros_like(sse_sc)
            ssh_sc[...] = jnp.zeros_like(ssh_sc)

        x = emb_ref[0]                                            # (tS, H) f32
        # cat((proj, emb), -1) @ W1  ==  proj @ W1[:E] (hoisted to wrapper) + emb @ W1[E:]
        xw1 = jnp.dot(x.astype(MATMUL_DTYPE), w1e_ref[...],
                      preferred_element_type=jnp.float32)         # bf16 x bf16 -> f32
        g = jnp.maximum(xw1 + pw1_ref[0], 0.0)                    # ReLU
        h = g * pw2_ref[0]                                        # (tS, H)

        h_sc[idx] = h                                             # keep H on-chip
        x_sc[idx] = x                                             # keep emb tile on-chip
        # per-lane partial sums of squares for the Frobenius norms
        sse_sc[...] += jnp.sum(x * x, axis=0, keepdims=True)
        ssh_sc[...] += jnp.sum(h * h, axis=0, keepdims=True)

    @pl.when(phase == 1)
    def _layernorm():
        @pl.when((b == 0) & (s == 0))
        def _():
            sse_tot = jnp.sum(sse_sc[...], axis=-1, keepdims=True)   # (1, 1)
            ssh_tot = jnp.sum(ssh_sc[...], axis=-1, keepdims=True)   # (1, 1)
            # guard ||H|| == 0 (torch's min(inf, 1) would give 1 anyway)
            ratio = jnp.sqrt(sse_tot) / jnp.sqrt(jnp.maximum(ssh_tot, 1e-30))
            alfa_sc[...] = jnp.minimum(BETA * ratio, 1.0)

        e = alfa_sc[...] * h_sc[idx] + x_sc[idx]                  # (tS, H)
        # one-pass variance: E[x^2] - mu^2 (single read of e, one elementwise pass)
        mu = jnp.mean(e, axis=-1, keepdims=True)
        m2 = jnp.mean(e * e, axis=-1, keepdims=True)
        rstd = jax.lax.rsqrt(m2 - mu * mu + LN_EPS)
        out_ref[0] = (e - mu) * rstd * gamma_ref[...] + beta_ref[...]
        # TODO(synk): nn.Dropout(0.2) is stochastic/training-only; eval-mode identity here.


def attn_gating_forward(embeddings, additional_features, params, *, seq_tile=None):
    Bb, S, Hd = embeddings.shape
    if seq_tile is None:
        seq_tile = S                  # at real sizes keep the full sequence per tile
    nS = S // seq_tile

    # tiny glue: nn.Linear(2, EMB), then hoist the M=1 projection matmuls out of the
    # kernel (they are recomputed identically for every sequence tile otherwise).
    proj = additional_features @ params["lin_w"].T + params["lin_b"]       # (B, E)
    pw1 = (proj @ params["W1"][:EMB]).reshape(Bb, 1, Hd)                   # proj part of cat-matmul
    pw2 = (proj @ params["W2"]).reshape(Bb, 1, Hd)
    w1e = params["W1"][EMB:].astype(MATMUL_DTYPE)                          # (H, H), bf16 weights

    grid = (2, Bb, nS)   # leading "phase" axis must run sequentially (global norms)

    out = pl.pallas_call(
        fused_gating_ln_kernel,
        grid=grid,
        in_specs=[
            # embeddings: fetched per (b, s) tile in phase 0; block index frozen at
            # (0,0,0) in phase 1 (phase 1 reads the VMEM stash, not HBM).
            pl.BlockSpec((1, seq_tile, Hd),
                         lambda p, b, s: ((1 - p) * b, (1 - p) * s, 0)),
            pl.BlockSpec((1, 1, Hd), lambda p, b, s: (b, 0, 0)),    # proj @ W1[:E]
            pl.BlockSpec((1, 1, Hd), lambda p, b, s: (b, 0, 0)),    # proj @ W2
            pl.BlockSpec((Hd, Hd), lambda p, b, s: (0, 0),
                         pipeline_mode=pl.Buffered(1)),             # constant weight: single-buffer
            pl.BlockSpec((1, Hd), lambda p, b, s: (0, 0)),          # LN gamma
            pl.BlockSpec((1, Hd), lambda p, b, s: (0, 0)),          # LN beta
        ],
        # Output block index is frozen at (0,0,0) during phase 0 (nothing is written
        # there), so no garbage write-back happens; real writes occur only in phase 1.
        out_specs=pl.BlockSpec((1, seq_tile, Hd),
                               lambda p, b, s: (p * b, p * s, 0)),
        out_shape=jax.ShapeDtypeStruct((Bb, S, Hd), jnp.float32),
        scratch_shapes=[
            pltpu.VMEM((Bb * nS, seq_tile, Hd), jnp.float32),   # gated H (never hits HBM)
            pltpu.VMEM((Bb * nS, seq_tile, Hd), jnp.float32),   # embeddings stash
            pltpu.VMEM((1, Hd), jnp.float32),                   # sum(emb^2) per lane
            pltpu.VMEM((1, Hd), jnp.float32),                   # sum(H^2) per lane
            pltpu.VMEM((1, 1), jnp.float32),                    # alfa scalar
        ],
        compiler_params=pltpu.CompilerParams(
            # All axes sequential: the phase ordering and the shared norm/H scratch
            # require it (megacore 'parallel' would race the global-norm accumulators).
            dimension_semantics=("arbitrary", "arbitrary", "arbitrary")),
    )(embeddings, pw1, pw2, w1e, params["gamma"], params["beta"])
    return out


def init_params(key):
    k1, k2, k3, k4 = jax.random.split(key, 4)
    return {
        "lin_w": jax.random.uniform(k1, (EMB, 2), jnp.float32, -0.5, 0.5),
        "lin_b": jax.random.uniform(k2, (EMB,), jnp.float32, -0.5, 0.5),
        "W1": jax.random.uniform(k3, (HIDDEN + EMB, HIDDEN), jnp.float32, -0.1, 0.1),
        "W2": jax.random.uniform(k4, (EMB, HIDDEN), jnp.float32, -0.1, 0.1),
        "gamma": jnp.ones((1, HIDDEN), jnp.float32),   # LayerNorm weight
        "beta": jnp.zeros((1, HIDDEN), jnp.float32),   # LayerNorm bias
    }


def ref_forward(embeddings, additional_features, params):
    # Faithful f32 reference of the PyTorch forward (eval mode).
    proj = additional_features @ params["lin_w"].T + params["lin_b"]
    projected = jnp.broadcast_to(proj[:, None, :], (embeddings.shape[0],
                                                    embeddings.shape[1], EMB))
    fc = jnp.concatenate([projected, embeddings], axis=2)
    g = jnp.maximum(fc @ params["W1"], 0.0)
    Hm = g * (projected @ params["W2"])
    alfa = jnp.minimum(BETA * jnp.linalg.norm(embeddings) / jnp.linalg.norm(Hm), 1.0)
    E = alfa * Hm + embeddings
    mu = E.mean(-1, keepdims=True)
    var = ((E - mu) ** 2).mean(-1, keepdims=True)
    return (E - mu) / jnp.sqrt(var + LN_EPS) * params["gamma"] + params["beta"]


if __name__ == "__main__":
    key = jax.random.PRNGKey(0)
    kp, ke, kf = jax.random.split(key, 3)
    params = init_params(kp)
    embeddings = jax.random.normal(ke, (B, SEQ, HIDDEN), jnp.float32)
    additional_features = jax.random.normal(kf, (B, 2), jnp.float32)

    out = attn_gating_forward(embeddings, additional_features, params)
    out = jax.block_until_ready(out)

    ref = ref_forward(embeddings, additional_features, params)
    assert out.shape == (B, SEQ, HIDDEN)
    # Tolerance loosened vs the pure-f32 reference: the emb @ W1[E:] matmul uses bf16
    # operands (f32 accumulation). The gated branch is scaled by alfa (~1e-2 here), so
    # the observed error is O(1e-4) with a comfortable margin under 1e-3.
    assert jnp.allclose(out, ref, rtol=1e-3, atol=1e-3), "mismatch vs JAX reference"
    print("KERNEL_OK")
</pallas_src>

<mosaic_0001>
module attributes {stable_mosaic.version = 11 : i64} {
  func.func @fused_gating_ln_kernel(%arg0: i32, %arg1: i32, %arg2: i32, %arg3: memref<1x8x128xf32, #tpu.memory_space<vmem>>, %arg4: memref<1x1x128xf32, #tpu.memory_space<vmem>>, %arg5: memref<1x1x128xf32, #tpu.memory_space<vmem>>, %arg6: memref<128x128xbf16, #tpu.memory_space<vmem>>, %arg7: memref<1x128xf32, #tpu.memory_space<vmem>>, %arg8: memref<1x128xf32, #tpu.memory_space<vmem>>, %arg9: memref<1x8x128xf32, #tpu.memory_space<vmem>>, %arg10: memref<2x8x128xf32, #tpu.memory_space<vmem>>, %arg11: memref<2x8x128xf32, #tpu.memory_space<vmem>>, %arg12: memref<1x128xf32, #tpu.memory_space<vmem>>, %arg13: memref<1x128xf32, #tpu.memory_space<vmem>>, %arg14: memref<1x1xf32, #tpu.memory_space<vmem>>) attributes {dimension_semantics = [#tpu.dimension_semantics<arbitrary>, #tpu.dimension_semantics<arbitrary>, #tpu.dimension_semantics<arbitrary>], iteration_bounds = array<i64: 2, 2, 1>, scalar_prefetch = 0 : i64, scratch_operands = 5 : i64, tpu.core_type = #tpu.core_type<tc>, window_params = [{transform_indices = @transform_0, window_bounds = array<i64: 1, 8, 128>}, {transform_indices = @transform_1, window_bounds = array<i64: 1, 1, 128>}, {transform_indices = @transform_2, window_bounds = array<i64: 1, 1, 128>}, {pipeline_mode = #tpu.pipeline_mode<synchronous>, transform_indices = @transform_3, window_bounds = array<i64: 128, 128>}, {pipeline_mode = #tpu.pipeline_mode<synchronous>, transform_indices = @transform_4, window_bounds = array<i64: 1, 128>}, {pipeline_mode = #tpu.pipeline_mode<synchronous>, transform_indices = @transform_5, window_bounds = array<i64: 1, 128>}, {transform_indices = @transform_6, window_bounds = array<i64: 1, 8, 128>}]} {
    %c1_i32 = arith.constant 1 : i32
    %0 = arith.muli %arg1, %c1_i32 : i32
    %1 = arith.addi %0, %arg2 : i32
    %c0_i32 = arith.constant 0 : i32
    %2 = arith.cmpi eq, %arg0, %c0_i32 : i32
    %3 = arith.extui %2 : i1 to i32
    %c0_i32_0 = arith.constant 0 : i32
    %4 = arith.cmpi ne, %3, %c0_i32_0 : i32
    scf.if %4 {
      %c0_i32_3 = arith.constant 0 : i32
      %8 = arith.cmpi eq, %arg1, %c0_i32_3 : i32
      %c0_i32_4 = arith.constant 0 : i32
      %9 = arith.cmpi eq, %arg2, %c0_i32_4 : i32
      %10 = arith.andi %8, %9 : i1
      %11 = arith.extui %10 : i1 to i32
      %c0_i32_5 = arith.constant 0 : i32
      %12 = arith.cmpi ne, %11, %c0_i32_5 : i32
      scf.if %12 {
        %cst_31 = arith.constant 0.000000e+00 : f32
        %48 = vector.broadcast %cst_31 : f32 to vector<1x128xf32>
        %c0_32 = arith.constant 0 : index
        %c0_33 = arith.constant 0 : index
        %49 = vector.load %arg12[%c0_32, %c0_33] : memref<1x128xf32, #tpu.memory_space<vmem>>, vector<1x128xf32>
        tpu.vector_store %arg12[%c0_32, %c0_33], %48 {strides = array<i32>} : memref<1x128xf32, #tpu.memory_space<vmem>>, vector<1x128xf32>,
        %cst_34 = arith.constant 0.000000e+00 : f32
        %50 = vector.broadcast %cst_34 : f32 to vector<1x128xf32>
        %c0_35 = arith.constant 0 : index
        %c0_36 = arith.constant 0 : index
        %51 = vector.load %arg13[%c0_35, %c0_36] : memref<1x128xf32, #tpu.memory_space<vmem>>, vector<1x128xf32>
        tpu.vector_store %arg13[%c0_35, %c0_36], %50 {strides = array<i32>} : memref<1x128xf32, #tpu.memory_space<vmem>>, vector<1x128xf32>,
      } else {
      }
      %c0 = arith.constant 0 : index
      %c0_6 = arith.constant 0 : index
      %c0_7 = arith.constant 0 : index
      %13 = vector.load %arg3[%c0, %c0_6, %c0_7] : memref<1x8x128xf32, #tpu.memory_space<vmem>>, vector<1x8x128xf32>
      %14 = vector.shape_cast %13 : vector<1x8x128xf32> to vector<8x128xf32>
      %15 = arith.truncf %14 : vector<8x128xf32> to vector<8x128xbf16>
      %c0_8 = arith.constant 0 : index
      %c0_9 = arith.constant 0 : index
      %16 = vector.load %arg6[%c0_8, %c0_9] : memref<128x128xbf16, #tpu.memory_space<vmem>>, vector<128x128xbf16>
      %cst = arith.constant dense<0.000000e+00> : vector<8x128xf32>
      %17 = tpu.matmul %15, %16, %cst {dimension_numbers = #tpu.dot_dimension_numbers<[1], [0], [0], [1], [0, 0, 1, 1], [], []>} : vector<8x128xbf16>, vector<128x128xbf16>, vector<8x128xf32> -> vector<8x128xf32>
      %c0_10 = arith.constant 0 : index
      %c0_11 = arith.constant 0 : index
      %c0_12 = arith.constant 0 : index
      %18 = vector.load %arg4[%c0_10, %c0_11, %c0_12] : memref<1x1x128xf32, #tpu.memory_space<vmem>>, vector<1x1x128xf32>
      %19 = vector.shape_cast %18 : vector<1x1x128xf32> to vector<1x128xf32>
      %20 = vector.broadcast %19 : vector<1x128xf32> to vector<8x128xf32>
      %21 = arith.addf %17, %20 : vector<8x128xf32>
      %cst_13 = arith.constant 0.000000e+00 : f32
      %22 = vector.broadcast %cst_13 : f32 to vector<8x128xf32>
      %23 = arith.maximumf %21, %22 : vector<8x128xf32>
      %c0_14 = arith.constant 0 : index
      %c0_15 = arith.constant 0 : index
      %c0_16 = arith.constant 0 : index
      %24 = vector.load %arg5[%c0_14, %c0_15, %c0_16] : memref<1x1x128xf32, #tpu.memory_space<vmem>>, vector<1x1x128xf32>
      %25 = vector.shape_cast %24 : vector<1x1x128xf32> to vector<1x128xf32>
      %26 = vector.broadcast %25 : vector<1x128xf32> to vector<8x128xf32>
      %27 = arith.mulf %23, %26 : vector<8x128xf32>
      %28 = arith.index_cast %1 : i32 to index
      %c0_17 = arith.constant 0 : index
      %c0_18 = arith.constant 0 : index
      %29 = vector.load %arg10[%28, %c0_17, %c0_18] : memref<2x8x128xf32, #tpu.memory_space<vmem>>, vector<1x8x128xf32>
      %30 = vector.shape_cast %29 : vector<1x8x128xf32> to vector<8x128xf32>
      %31 = vector.shape_cast %27 : vector<8x128xf32> to vector<1x8x128xf32>
      tpu.vector_store %arg10[%28, %c0_17, %c0_18], %31 {strides = array<i32>} : memref<2x8x128xf32, #tpu.memory_space<vmem>>, vector<1x8x128xf32>,
      %32 = arith.index_cast %1 : i32 to index
      %c0_19 = arith.constant 0 : index
      %c0_20 = arith.constant 0 : index
      %33 = vector.load %arg11[%32, %c0_19, %c0_20] : memref<2x8x128xf32, #tpu.memory_space<vmem>>, vector<1x8x128xf32>
      %34 = vector.shape_cast %33 : vector<1x8x128xf32> to vector<8x128xf32>
      %35 = vector.shape_cast %14 : vector<8x128xf32> to vector<1x8x128xf32>
      tpu.vector_store %arg11[%32, %c0_19, %c0_20], %35 {strides = array<i32>} : memref<2x8x128xf32, #tpu.memory_space<vmem>>, vector<1x8x128xf32>,
      %c0_21 = arith.constant 0 : index
      %c0_22 = arith.constant 0 : index
      %36 = vector.load %arg12[%c0_21, %c0_22] : memref<1x128xf32, #tpu.memory_space<vmem>>, vector<1x128xf32>
      %37 = arith.mulf %14, %14 : vector<8x128xf32>
      %cst_23 = arith.constant dense<0.000000e+00> : vector<128xf32>
      %38 = vector.multi_reduction <add>, %37, %cst_23 [0] : vector<8x128xf32> to vector<128xf32>
      %39 = vector.shape_cast %38 : vector<128xf32> to vector<1x128xf32>
      %40 = arith.addf %36, %39 : vector<1x128xf32>
      %c0_24 = arith.constant 0 : index
      %c0_25 = arith.constant 0 : index
      %41 = vector.load %arg12[%c0_24, %c0_25] : memref<1x128xf32, #tpu.memory_space<vmem>>, vector<1x128xf32>
      tpu.vector_store %arg12[%c0_24, %c0_25], %40 {strides = array<i32>} : memref<1x128xf32, #tpu.memory_space<vmem>>, vector<1x128xf32>,
      %c0_26 = arith.constant 0 : index
      %c0_27 = arith.constant 0 : index
      %42 = vector.load %arg13[%c0_26, %c0_27] : memref<1x128xf32, #tpu.memory_space<vmem>>, vector<1x128xf32>
      %43 = arith.mulf %27, %27 : vector<8x128xf32>
      %cst_28 = arith.constant dense<0.000000e+00> : vector<128xf32>
      %44 = vector.multi_reduction <add>, %43, %cst_28 [0] : vector<8x128xf32> to vector<128xf32>
      %45 = vector.shape_cast %44 : vector<128xf32> to vector<1x128xf32>
      %46 = arith.addf %42, %45 : vector<1x128xf32>
      %c0_29 = arith.constant 0 : index
      %c0_30 = arith.constant 0 : index
      %47 = vector.load %arg13[%c0_29, %c0_30] : memref<1x128xf32, #tpu.memory_space<vmem>>, vector<1x128xf32>
      tpu.vector_store %arg13[%c0_29, %c0_30], %46 {strides = array<i32>} : memref<1x128xf32, #tpu.memory_space<vmem>>, vector<1x128xf32>,
    } else {
    }
    %c1_i32_1 = arith.constant 1 : i32
    %5 = arith.cmpi eq, %arg0, %c1_i32_1 : i32
    %6 = arith.extui %5 : i1 to i32
    %c0_i32_2 = arith.constant 0 : i32
    %7 = arith.cmpi ne, %6, %c0_i32_2 : i32
    scf.if %7 {
      %c0_i32_3 = arith.constant 0 : i32
      %8 = arith.cmpi eq, %arg1, %c0_i32_3 : i32
      %c0_i32_4 = arith.constant 0 : i32
      %9 = arith.cmpi eq, %arg2, %c0_i32_4 : i32
      %10 = arith.andi %8, %9 : i1
      %11 = arith.extui %10 : i1 to i32
      %c0_i32_5 = arith.constant 0 : i32
      %12 = arith.cmpi ne, %11, %c0_i32_5 : i32
      scf.if %12 {
        %c0_22 = arith.constant 0 : index
        %c0_23 = arith.constant 0 : index
        %50 = vector.load %arg12[%c0_22, %c0_23] : memref<1x128xf32, #tpu.memory_space<vmem>>, vector<1x128xf32>
        %cst_24 = arith.constant dense<0.000000e+00> : vector<1xf32>
        %51 = vector.multi_reduction <add>, %50, %cst_24 [1] : vector<1x128xf32> to vector<1xf32>
        %52 = vector.shape_cast %51 : vector<1xf32> to vector<1x1xf32>
        %c0_25 = arith.constant 0 : index
        %c0_26 = arith.constant 0 : index
        %53 = vector.load %arg13[%c0_25, %c0_26] : memref<1x128xf32, #tpu.memory_space<vmem>>, vector<1x128xf32>
        %cst_27 = arith.constant dense<0.000000e+00> : vector<1xf32>
        %54 = vector.multi_reduction <add>, %53, %cst_27 [1] : vector<1x128xf32> to vector<1xf32>
        %55 = vector.shape_cast %54 : vector<1xf32> to vector<1x1xf32>
        %56 = math.sqrt %52 : vector<1x1xf32>
        %cst_28 = arith.constant 1.000000e-30 : f32
        %57 = vector.broadcast %cst_28 : f32 to vector<1x1xf32>
        %58 = arith.maximumf %55, %57 : vector<1x1xf32>
        %59 = math.sqrt %58 : vector<1x1xf32>
        %60 = arith.divf %56, %59 : vector<1x1xf32>
        %cst_29 = arith.constant 1.000000e-03 : f32
        %61 = vector.broadcast %cst_29 : f32 to vector<1x1xf32>
        %62 = arith.mulf %61, %60 : vector<1x1xf32>
        %cst_30 = arith.constant 1.000000e+00 : f32
        %63 = vector.broadcast %cst_30 : f32 to vector<1x1xf32>
        %64 = arith.minimumf %62, %63 : vector<1x1xf32>
        %c0_31 = arith.constant 0 : index
        %c0_32 = arith.constant 0 : index
        %65 = vector.load %arg14[%c0_31, %c0_32] : memref<1x1xf32, #tpu.memory_space<vmem>>, vector<1x1xf32>
        tpu.vector_store %arg14[%c0_31, %c0_32], %64 {strides = array<i32>} : memref<1x1xf32, #tpu.memory_space<vmem>>, vector<1x1xf32>,
      } else {
      }
      %c0 = arith.constant 0 : index
      %c0_6 = arith.constant 0 : index
      %13 = vector.load %arg14[%c0, %c0_6] : memref<1x1xf32, #tpu.memory_space<vmem>>, vector<1x1xf32>
      %14 = arith.index_cast %1 : i32 to index
      %c0_7 = arith.constant 0 : index
      %c0_8 = arith.constant 0 : index
      %15 = vector.load %arg10[%14, %c0_7, %c0_8] : memref<2x8x128xf32, #tpu.memory_space<vmem>>, vector<1x8x128xf32>
      %16 = vector.shape_cast %15 : vector<1x8x128xf32> to vector<8x128xf32>
      %17 = vector.broadcast %13 : vector<1x1xf32> to vector<8x128xf32>
      %18 = arith.mulf %17, %16 : vector<8x128xf32>
      %19 = arith.index_cast %1 : i32 to index
      %c0_9 = arith.constant 0 : index
      %c0_10 = arith.constant 0 : index
      %20 = vector.load %arg11[%19, %c0_9, %c0_10] : memref<2x8x128xf32, #tpu.memory_space<vmem>>, vector<1x8x128xf32>
      %21 = vector.shape_cast %20 : vector<1x8x128xf32> to vector<8x128xf32>
      %22 = arith.addf %18, %21 : vector<8x128xf32>
      %cst = arith.constant dense<0.000000e+00> : vector<8xf32>
      %23 = vector.multi_reduction <add>, %22, %cst [1] : vector<8x128xf32> to vector<8xf32>
      %24 = vector.shape_cast %23 : vector<8xf32> to vector<8x1xf32>
      %cst_11 = arith.constant 1.280000e+02 : f32
      %25 = vector.broadcast %cst_11 : f32 to vector<8x1xf32>
      %26 = arith.divf %24, %25 : vector<8x1xf32>
      %27 = arith.mulf %22, %22 : vector<8x128xf32>
      %cst_12 = arith.constant dense<0.000000e+00> : vector<8xf32>
      %28 = vector.multi_reduction <add>, %27, %cst_12 [1] : vector<8x128xf32> to vector<8xf32>
      %29 = vector.shape_cast %28 : vector<8xf32> to vector<8x1xf32>
      %cst_13 = arith.constant 1.280000e+02 : f32
      %30 = vector.broadcast %cst_13 : f32 to vector<8x1xf32>
      %31 = arith.divf %29, %30 : vector<8x1xf32>
      %32 = arith.mulf %26, %26 : vector<8x1xf32>
      %33 = arith.subf %31, %32 : vector<8x1xf32>
      %cst_14 = arith.constant 9.99999974E-6 : f32
      %34 = vector.broadcast %cst_14 : f32 to vector<8x1xf32>
      %35 = arith.addf %33, %34 : vector<8x1xf32>
      %36 = math.rsqrt %35 : vector<8x1xf32>
      %37 = vector.broadcast %26 : vector<8x1xf32> to vector<8x128xf32>
      %38 = arith.subf %22, %37 : vector<8x128xf32>
      %39 = vector.broadcast %36 : vector<8x1xf32> to vector<8x128xf32>
      %40 = arith.mulf %38, %39 : vector<8x128xf32>
      %c0_15 = arith.constant 0 : index
      %c0_16 = arith.constant 0 : index
      %41 = vector.load %arg7[%c0_15, %c0_16] : memref<1x128xf32, #tpu.memory_space<vmem>>, vector<1x128xf32>
      %42 = vector.broadcast %41 : vector<1x128xf32> to vector<8x128xf32>
      %43 = arith.mulf %40, %42 : vector<8x128xf32>
      %c0_17 = arith.constant 0 : index
      %c0_18 = arith.constant 0 : index
      %44 = vector.load %arg8[%c0_17, %c0_18] : memref<1x128xf32, #tpu.memory_space<vmem>>, vector<1x128xf32>
      %45 = vector.broadcast %44 : vector<1x128xf32> to vector<8x128xf32>
      %46 = arith.addf %43, %45 : vector<8x128xf32>
      %c0_19 = arith.constant 0 : index
      %c0_20 = arith.constant 0 : index
      %c0_21 = arith.constant 0 : index
      %47 = vector.load %arg9[%c0_19, %c0_20, %c0_21] : memref<1x8x128xf32, #tpu.memory_space<vmem>>, vector<1x8x128xf32>
      %48 = vector.shape_cast %47 : vector<1x8x128xf32> to vector<8x128xf32>
      %49 = vector.shape_cast %46 : vector<8x128xf32> to vector<1x8x128xf32>
      tpu.vector_store %arg9[%c0_19, %c0_20, %c0_21], %49 {strides = array<i32>} : memref<1x8x128xf32, #tpu.memory_space<vmem>>, vector<1x8x128xf32>,
    } else {
    }
    return
  }
  func.func @transform_0(%arg0: i32, %arg1: i32, %arg2: i32) -> (i32, i32, i32) {
    %c1_i32 = arith.constant 1 : i32
    %0 = arith.subi %c1_i32, %arg0 : i32
    %1 = arith.muli %0, %arg1 : i32
    %c1_i32_0 = arith.constant 1 : i32
    %2 = arith.subi %c1_i32_0, %arg0 : i32
    %3 = arith.muli %2, %arg2 : i32
    %c0_i32 = arith.constant 0 : i32
    %c0_i32_1 = arith.constant 0 : i32
    return %1, %3, %c0_i32 : i32, i32, i32
  }
  func.func @transform_1(%arg0: i32, %arg1: i32, %arg2: i32) -> (i32, i32, i32) {
    %c0_i32 = arith.constant 0 : i32
    %c0_i32_0 = arith.constant 0 : i32
    %c0_i32_1 = arith.constant 0 : i32
    return %arg1, %c0_i32, %c0_i32_0 : i32, i32, i32
  }
  func.func @transform_2(%arg0: i32, %arg1: i32, %arg2: i32) -> (i32, i32, i32) {
    %c0_i32 = arith.constant 0 : i32
    %c0_i32_0 = arith.constant 0 : i32
    %c0_i32_1 = arith.constant 0 : i32
    return %arg1, %c0_i32, %c0_i32_0 : i32, i32, i32
  }
  func.func @transform_3(%arg0: i32, %arg1: i32, %arg2: i32) -> (i32, i32) {
    %c0_i32 = arith.constant 0 : i32
    %c0_i32_0 = arith.constant 0 : i32
    %c0_i32_1 = arith.constant 0 : i32
    return %c0_i32, %c0_i32_0 : i32, i32
  }
  func.func @transform_4(%arg0: i32, %arg1: i32, %arg2: i32) -> (i32, i32) {
    %c0_i32 = arith.constant 0 : i32
    %c0_i32_0 = arith.constant 0 : i32
    %c0_i32_1 = arith.constant 0 : i32
    return %c0_i32, %c0_i32_0 : i32, i32
  }
  func.func @transform_5(%arg0: i32, %arg1: i32, %arg2: i32) -> (i32, i32) {
    %c0_i32 = arith.constant 0 : i32
    %c0_i32_0 = arith.constant 0 : i32
    %c0_i32_1 = arith.constant 0 : i32
    return %c0_i32, %c0_i32_0 : i32, i32
  }
  func.func @transform_6(%arg0: i32, %arg1: i32, %arg2: i32) -> (i32, i32, i32) {
    %0 = arith.muli %arg0, %arg1 : i32
    %1 = arith.muli %arg0, %arg2 : i32
    %c0_i32 = arith.constant 0 : i32
    %c0_i32_0 = arith.constant 0 : i32
    return %0, %1, %c0_i32 : i32, i32, i32
  }
}

</mosaic_0001>

<llo_original>
// kernel: tpu_custom_call.1
$region0: #{tpu_custom_call.1}
  #allocation0 [shape = 'u32[]', space=smem, size = 0x4, offset = 0x4, fixed_abs, tag = 'smem constant byte address 0x4 - core index']
  #allocation1 [shape = 'u32[144,128]{1,0:T(1,128)}', space=vmem, size = 0x12000, scoped, tag = 'internal scratch']
  #allocation2 [shape = 'f32[2,8,128]{2,1,0:T(8,128)}', space=vmem, size = 0x2000, scoped, tag = 'scratch operand']
  #allocation3 [shape = 'f32[2,8,128]{2,1,0:T(8,128)}', space=vmem, size = 0x2000, scoped, tag = 'scratch operand']
  #allocation4 [shape = 'f32[1,128]{1,0:T(1,128)}', space=vmem, size = 0x200, scoped, tag = 'scratch operand']
  #allocation5 [shape = 'f32[1,128]{1,0:T(1,128)}', space=vmem, size = 0x200, scoped, tag = 'scratch operand']
  #allocation6 [shape = 'f32[1,1]{1,0:T(1,128)}', space=vmem, size = 0x200, scoped, tag = 'scratch operand']
  %s0 = inlined_call_operand.hbm [shape: f32[2,8,128], index: 0, kind: input, shape index: {}]
  %s1 = inlined_call_operand.vmem [shape: f32[2,1,128], index: 1, kind: input, shape index: {}]
  %s2 = inlined_call_operand.vmem [shape: f32[2,1,128], index: 2, kind: input, shape index: {}]
  %s3 = inlined_call_operand.hbm [shape: bf16[128,128], index: 3, kind: input, shape index: {}]
  %s4 = inlined_call_operand.vmem [shape: f32[1,128], index: 4, kind: input, shape index: {}]
  %s5 = inlined_call_operand.vmem [shape: f32[1,128], index: 5, kind: input, shape index: {}]
  %s6 = inlined_call_operand.hbm [shape: f32[2,8,128], index: 6, kind: output, shape index: {}]
  %s7 = sld [smem:[#allocation0]]
  $region81: #{tpu_custom_call.1} parent=0
    _
  %s9 = ssub.s32 1, %s7
  %s10 = scalar_select 0, %s9, %s7
  $region1: #{tpu_custom_call.1} parent=0
    #allocation7 [shape = 'u8[8192]{0}', space=vmem, size = 0x2000, scoped, tag = 'input window, operand 0']
    #allocation8 [shape = 's32[2]{0}', space=sflag, size = 0x8, scoped, tag = 'scoped memory for tpu_custom_call.1']
    #allocation9 [shape = 's32[2]{0}', space=sflag, size = 0x8, scoped, tag = 'scoped memory for tpu_custom_call.1']
    #allocation10 [shape = 'u8[32768]{0}', space=vmem, size = 0x8000, scoped, tag = 'input window, operand 3, single buffered']
    #allocation11 [shape = 's32[1]{0}', space=sflag, size = 0x4, scoped, tag = 'scoped memory for tpu_custom_call.1']
    #allocation12 [shape = 'u8[8192]{0}', space=vmem, size = 0x2000, scoped, tag = 'output window, operand 0']
    %11 = vsyncpa [#allocation8], 0
    %s12 = scalar_lea.sflag [#allocation8], 1
    %13 = vsyncpa %s12, 0
    %14 = vsyncpa [#allocation11], 0
    %15 = vsyncpa [#allocation9], 0
    %s16 = scalar_lea.sflag [#allocation9], 1
    %17 = vsyncpa %s16, 0
    loop: start=0, step=1, limit=6
    $region2: #{tpu_custom_call.1} parent=1 // loop_pre_header
      _
    $region3: #{tpu_custom_call.1} parent=1 // loop_header
      %s19 = sphi 0, %s23
      %p20 = scmp.ge.s32.totalorder %s19, 6
      %s26 = sphi 0, %s45
      %s27 = sphi 0, %s41
      %s28 = sphi 0, %s37
      %s29 = sphi 0, %s26
      %s30 = sphi 0, %s27
      %s31 = sphi 0, %s28
      %s32 = sphi 0, %s29
      %s33 = sphi 0, %s30
      %s34 = sphi 0, %s31
      %s56 = sphi 0, %s58
      %s59 = sphi 0, %s56
      %s60 = sphi 0, %s59
      %s76 = sphi 0, %s60
      %s82 = sphi 0, %s84
      %s85 = sphi 0, %s82
      %s86 = sphi 0, %s85
      %s102 = sphi 0, %s86
      %s108 = sphi 0, %s110
      %s111 = sphi 0, %s108
      %s112 = sphi 0, %s111
      %s128 = sphi 0, %s112
      %s132 = sphi 0, %s132
      %s134 = sphi 0, %s132
      %s135 = sphi 0, %s134
      %s149 = sphi 0, %s135
      %s153 = sphi 0, %s153
      %s155 = sphi 0, %s153
      %s156 = sphi 0, %s155
      %s170 = sphi 0, %s156
      %s174 = sphi 0, %s174
      %s176 = sphi 0, %s174
      %s177 = sphi 0, %s176
      %s191 = sphi 0, %s177
      %s203 = sphi 0, %s205
      %s206 = sphi 0, %s203
      %s207 = sphi 0, %s206
      %s223 = sphi 0, %s207
    $region4: #{tpu_custom_call.1} parent=1 // loop_header_branch
      %22 = sbr.rel (%p20) target = $region8
    $region5: #{tpu_custom_call.1} parent=1 // loop_body
      %s24 = ssub.s32 %s19, 1
      %s25 = ssub.s32 %s19, 2
      %s35 = sadd.s32 1, %s28
      %p36 = scmp.ge.s32.totalorder %s35, 1
      %s37 = scalar_select %p36, 0, %s35
      %s38 = sadd.s32 1, %s27
      %s39 = scalar_select %p36, %s38, %s27
      %p40 = scmp.ge.s32.totalorder %s39, 2
      %s41 = scalar_select %p40, 0, %s39
      %s42 = sadd.s32 1, %s26
      %s43 = scalar_select %p40, %s42, %s26
      %p44 = scmp.ge.s32.totalorder %s43, 2
      %s45 = scalar_select %p44, 0, %s43
      %s46 = ssub.s32 1, %s26
      %s47 = smul.u32 %s46, %s27
      %s48 = smul.u32 %s46, %s28
      %s49 = ssub.s32 1, %s45
      %s50 = smul.u32 %s49, %s41
      %s51 = smul.u32 %s49, %s37
      %s52 = ssub.s32 %s47, %s50
      %s53 = ssub.s32 %s48, %s51
      %s54 = sor.u32 %s52, %s53
      %p55 = scmp.eq.s32.totalorder %s54, 0
      %s57 = sadd.s32 %s56, 1
      %s58 = scalar_select %p55, %s56, %s57
      %p61 = pneg %p55
      %p62 = scmp.eq.s32.totalorder %s19, 3
      %p63 = por %p61, %p62
      %p64 = scmp.ne.s32.totalorder %s56, %s59
      %p65 = scmp.eq.s32.totalorder %s19, 0
      %p66 = por %p64, %p65
      %p67 = scmp.ne.s32.totalorder %s56, %s59
      %p68 = scmp.eq.s32.totalorder %s24, 3
      %p69 = por %p67, %p68
      %p70 = scmp.ne.s32.totalorder %s59, %s60
      %p71 = scmp.eq.s32.totalorder %s24, 0
      %p72 = por %p70, %p71
      %p73 = scmp.ne.s32.totalorder %s59, %s60
      %p74 = scmp.eq.s32.totalorder %s25, 3
      %p75 = por %p73, %p74
      %p77 = scmp.ne.s32.totalorder %s60, %s76
      %p78 = scmp.eq.s32.totalorder %s25, 0
      %p79 = por %p77, %p78
      %s80 = ssub.s32 %s27, %s41
      %p81 = scmp.eq.s32.totalorder %s80, 0
      %s83 = sadd.s32 %s82, 1
      %s84 = scalar_select %p81, %s82, %s83
      %p87 = pneg %p81
      %p88 = scmp.eq.s32.totalorder %s19, 3
      %p89 = por %p87, %p88
      %p90 = scmp.ne.s32.totalorder %s82, %s85
      %p91 = scmp.eq.s32.totalorder %s19, 0
      %p92 = por %p90, %p91
      %p93 = scmp.ne.s32.totalorder %s82, %s85
      %p94 = scmp.eq.s32.totalorder %s24, 3
      %p95 = por %p93, %p94
      %p96 = scmp.ne.s32.totalorder %s85, %s86
      %p97 = scmp.eq.s32.totalorder %s24, 0
      %p98 = por %p96, %p97
      %p99 = scmp.ne.s32.totalorder %s85, %s86
      %p100 = scmp.eq.s32.totalorder %s25, 3
      %p101 = por %p99, %p100
      %p103 = scmp.ne.s32.totalorder %s86, %s102
      %p104 = scmp.eq.s32.totalorder %s25, 0
      %p105 = por %p103, %p104
      %s106 = ssub.s32 %s27, %s41
      %p107 = scmp.eq.s32.totalorder %s106, 0
      %s109 = sadd.s32 %s108, 1
      %s110 = scalar_select %p107, %s108, %s109
      %p113 = pneg %p107
      %p114 = scmp.eq.s32.totalorder %s19, 3
      %p115 = por %p113, %p114
      %p116 = scmp.ne.s32.totalorder %s108, %s111
      %p117 = scmp.eq.s32.totalorder %s19, 0
      %p118 = por %p116, %p117
      %p119 = scmp.ne.s32.totalorder %s108, %s111
      %p120 = scmp.eq.s32.totalorder %s24, 3
      %p121 = por %p119, %p120
      %p122 = scmp.ne.s32.totalorder %s111, %s112
      %p123 = scmp.eq.s32.totalorder %s24, 0
      %p124 = por %p122, %p123
      %p125 = scmp.ne.s32.totalorder %s111, %s112
      %p126 = scmp.eq.s32.totalorder %s25, 3
      %p127 = por %p125, %p126
      %p129 = scmp.ne.s32.totalorder %s112, %s128
      %p130 = scmp.eq.s32.totalorder %s25, 0
      %p131 = por %p129, %p130
      %s133 = sadd.s32 %s132, 1
      %p136 = scmp.eq.s32.totalorder %s19, 3
      %p137 = scmp.ne.s32.totalorder %s132, %s134
      %p138 = scmp.eq.s32.totalorder %s19, 0
      %p139 = por %p137, %p138
      %p140 = scmp.ne.s32.totalorder %s132, %s134
      %p141 = scmp.eq.s32.totalorder %s24, 3
      %p142 = por %p140, %p141
      %p143 = scmp.ne.s32.totalorder %s134, %s135
      %p144 = scmp.eq.s32.totalorder %s24, 0
      %p145 = por %p143, %p144
      %p146 = scmp.ne.s32.totalorder %s134, %s135
      %p147 = scmp.eq.s32.totalorder %s25, 3
      %p148 = por %p146, %p147
      %p150 = scmp.ne.s32.totalorder %s135, %s149
      %p151 = scmp.eq.s32.totalorder %s25, 0
      %p152 = por %p150, %p151
      %s154 = sadd.s32 %s153, 1
      %p157 = scmp.eq.s32.totalorder %s19, 3
      %p158 = scmp.ne.s32.totalorder %s153, %s155
      %p159 = scmp.eq.s32.totalorder %s19, 0
      %p160 = por %p158, %p159
      %p161 = scmp.ne.s32.totalorder %s153, %s155
      %p162 = scmp.eq.s32.totalorder %s24, 3
      %p163 = por %p161, %p162
      %p164 = scmp.ne.s32.totalorder %s155, %s156
      %p165 = scmp.eq.s32.totalorder %s24, 0
      %p166 = por %p164, %p165
      %p167 = scmp.ne.s32.totalorder %s155, %s156
      %p168 = scmp.eq.s32.totalorder %s25, 3
      %p169 = por %p167, %p168
      %p171 = scmp.ne.s32.totalorder %s156, %s170
      %p172 = scmp.eq.s32.totalorder %s25, 0
      %p173 = por %p171, %p172
      %s175 = sadd.s32 %s174, 1
      %p178 = scmp.eq.s32.totalorder %s19, 3
      %p179 = scmp.ne.s32.totalorder %s174, %s176
      %p180 = scmp.eq.s32.totalorder %s19, 0
      %p181 = por %p179, %p180
      %p182 = scmp.ne.s32.totalorder %s174, %s176
      %p183 = scmp.eq.s32.totalorder %s24, 3
      %p184 = por %p182, %p183
      %p185 = scmp.ne.s32.totalorder %s176, %s177
      %p186 = scmp.eq.s32.totalorder %s24, 0
      %p187 = por %p185, %p186
      %p188 = scmp.ne.s32.totalorder %s176, %s177
      %p189 = scmp.eq.s32.totalorder %s25, 3
      %p190 = por %p188, %p189
      %p192 = scmp.ne.s32.totalorder %s177, %s191
      %p193 = scmp.eq.s32.totalorder %s25, 0
      %p194 = por %p192, %p193
      %s195 = smul.u32 %s26, %s27
      %s196 = smul.u32 %s26, %s28
      %s197 = smul.u32 %s45, %s41
      %s198 = smul.u32 %s45, %s37
      %s199 = ssub.s32 %s195, %s197
      %s200 = ssub.s32 %s196, %s198
      %s201 = sor.u32 %s199, %s200
      %p202 = scmp.eq.s32.totalorder %s201, 0
      %s204 = sadd.s32 %s203, 1
      %s205 = scalar_select %p202, %s203, %s204
      %p208 = pneg %p202
      %p209 = scmp.eq.s32.totalorder %s19, 3
      %p210 = por %p208, %p209
      %p211 = scmp.ne.s32.totalorder %s203, %s206
      %p212 = scmp.eq.s32.totalorder %s19, 0
      %p213 = por %p211, %p212
      %p214 = scmp.ne.s32.totalorder %s203, %s206
      %p215 = scmp.eq.s32.totalorder %s24, 3
      %p216 = por %p214, %p215
      %p217 = scmp.ne.s32.totalorder %s206, %s207
      %p218 = scmp.eq.s32.totalorder %s24, 0
      %p219 = por %p217, %p218
      %p220 = scmp.ne.s32.totalorder %s206, %s207
      %p221 = scmp.eq.s32.totalorder %s25, 3
      %p222 = por %p220, %p221
      %p224 = scmp.ne.s32.totalorder %s207, %s223
      %p225 = scmp.eq.s32.totalorder %s25, 0
      %p226 = por %p224, %p225
      %p227 = scmp.le.s32.totalorder 1, %s19
      %p228 = scmp.lt.s32.totalorder %s19, 5
      %p229 = pnand %p227, %p228
      %p230 = pneg %p229
      // Predicated region
      $region9: #{tpu_custom_call.1} parent=5 // pred_check
        _
      $region10: #{tpu_custom_call.1} parent=5 // pred_check_branch
        %232 = sbr.rel (%p229) target = $region12
      $region11: #{tpu_custom_call.1} parent=5 // pred_region
        %s233 = ssub.s32 %s19, 1
        // Predicated region
        $region13: #{tpu_custom_call.1} parent=11 // pred_check
          %p234 = pneg %p145
        $region14: #{tpu_custom_call.1} parent=11 // pred_check_branch
          %236 = sbr.rel (%p234) target = $region16
        $region15: #{tpu_custom_call.1} parent=11 // pred_region
          %s238 = ssub.s32 1024, 1024
          %239 = vsyncadd [#allocation11], %s238
          %s240 = sshll.u32 [#allocation10], 4
          %s241 = int_to_ptr.vmem [resolvable:$true] %s240
          %246 = dma.hbm_to_vmem [thread:$0]  %s3, 1024, %s241, [#allocation11], 64, 64, 4
        $region16: #{tpu_custom_call.1} parent=11 // pred_fallthru
          _
        // Predicated region
        $region17: #{tpu_custom_call.1} parent=11 // pred_check
          %p247 = pneg %p166
        $region18: #{tpu_custom_call.1} parent=11 // pred_check_branch
          %249 = sbr.rel (%p247) target = $region20
        $region19: #{tpu_custom_call.1} parent=11 // pred_region
          _
        $region20: #{tpu_custom_call.1} parent=11 // pred_fallthru
          _
        // Predicated region
        $region21: #{tpu_custom_call.1} parent=11 // pred_check
          %p250 = pneg %p187
        $region22: #{tpu_custom_call.1} parent=11 // pred_check_branch
          %252 = sbr.rel (%p250) target = $region24
        $region23: #{tpu_custom_call.1} parent=11 // pred_region
          _
        $region24: #{tpu_custom_call.1} parent=11 // pred_fallthru
          _
      $region12: #{tpu_custom_call.1} parent=5 // pred_fallthru
        _
      %p253 = scmp.lt.s32.totalorder %s19, 4
      // Predicated region
      $region25: #{tpu_custom_call.1} parent=5 // pred_check
        %p254 = pneg %p253
      $region26: #{tpu_custom_call.1} parent=5 // pred_check_branch
        %256 = sbr.rel (%p254) target = $region28
      $region27: #{tpu_custom_call.1} parent=5 // pred_region
        // Predicated region
        $region29: #{tpu_custom_call.1} parent=27 // pred_check
          %p257 = pneg %p66
        $region30: #{tpu_custom_call.1} parent=27 // pred_check_branch
          %259 = sbr.rel (%p257) target = $region32
        $region31: #{tpu_custom_call.1} parent=27 // pred_region
          %s260 = sand.u32 %s56, 1
          %s261 = scalar_lea.sflag [#allocation8], %s260
          %s262 = sand.u32 %s56, 1
          %s263 = smul.addr %s262, 8
          %s264 = scalar_lea.vmem [#allocation7], %s263
          %s265 = ssub.s32 1, %s26
          %s266 = smul.u32 %s265, %s27
          %s267 = smul.u32 %s265, %s28
          %s269 = ssub.s32 128, 128
          %270 = vsyncadd %s261, %s269
          %s271 = sadd.s32 %s267, %s266
          %s272 = smul.addr %s271, 128
          %s273 = scalar_lea.hbm %s0, %s272
          %s275 = sshll.u32 %s264, 4
          %s276 = int_to_ptr.vmem [resolvable:$true] %s275
          %278 = dma.hbm_to_vmem [thread:$0]  %s273, 128, %s276, %s261
        $region32: #{tpu_custom_call.1} parent=27 // pred_fallthru
          _
        // Predicated region
        $region33: #{tpu_custom_call.1} parent=27 // pred_check
          %p279 = pneg %p92
        $region34: #{tpu_custom_call.1} parent=27 // pred_check_branch
          %281 = sbr.rel (%p279) target = $region36
        $region35: #{tpu_custom_call.1} parent=27 // pred_region
          %p282 = scmp.lt.s32.totalorder %s27, 1
          %s283 = scalar_select %p282, %s27, 1
          %s284 = scalar_lea.vmem %s1, %s283
        $region36: #{tpu_custom_call.1} parent=27 // pred_fallthru
          _
        // Predicated region
        $region37: #{tpu_custom_call.1} parent=27 // pred_check
          %p285 = pneg %p118
        $region38: #{tpu_custom_call.1} parent=27 // pred_check_branch
          %287 = sbr.rel (%p285) target = $region40
        $region39: #{tpu_custom_call.1} parent=27 // pred_region
          %p288 = scmp.lt.s32.totalorder %s27, 1
          %s289 = scalar_select %p288, %s27, 1
          %s290 = scalar_lea.vmem %s2, %s289
        $region40: #{tpu_custom_call.1} parent=27 // pred_fallthru
          _
      $region28: #{tpu_custom_call.1} parent=5 // pred_fallthru
        _
      %p291 = scmp.le.s32.totalorder 1, %s19
      %p292 = scmp.lt.s32.totalorder %s19, 5
      %p293 = pnand %p291, %p292
      %p294 = pneg %p293
      // Predicated region
      $region41: #{tpu_custom_call.1} parent=5 // pred_check
        _
      $region42: #{tpu_custom_call.1} parent=5 // pred_check_branch
        %296 = sbr.rel (%p293) target = $region44
      $region43: #{tpu_custom_call.1} parent=5 // pred_region
        %s297 = ssub.s32 %s19, 1
        %s298 = sand.u32 %s59, 1
        %s299 = scalar_lea.sflag [#allocation8], %s298
        %s300 = sand.u32 %s59, 1
        %s301 = smul.addr %s300, 8
        %s302 = scalar_lea.vmem [#allocation7], %s301
        // Predicated region
        $region45: #{tpu_custom_call.1} parent=43 // pred_check
          %p303 = pneg %p72
        $region46: #{tpu_custom_call.1} parent=43 // pred_check_branch
          %305 = sbr.rel (%p303) target = $region48
        $region47: #{tpu_custom_call.1} parent=43 // pred_region
          %306 = dma.done %s299, 128
        $region48: #{tpu_custom_call.1} parent=43 // pred_fallthru
          _
        // Predicated region
        $region49: #{tpu_custom_call.1} parent=43 // pred_check
          %p307 = pneg %p145
        $region50: #{tpu_custom_call.1} parent=43 // pred_check_branch
          %309 = sbr.rel (%p307) target = $region52
        $region51: #{tpu_custom_call.1} parent=43 // pred_region
          %310 = dma.done [#allocation11], 1024
        $region52: #{tpu_custom_call.1} parent=43 // pred_fallthru
          _
        %s311 = sand.u32 %s59, 1
        %s312 = scalar_lea.sflag [#allocation8], %s311
        %s313 = sand.u32 %s59, 1
        %s314 = smul.addr %s313, 8
        %s315 = scalar_lea.vmem [#allocation7], %s314
        %p316 = pneg %p72
        %p317 = pneg %p69
        %p318 = scmp.lt.s32.totalorder %s30, 1
        %s319 = scalar_select %p318, %s30, 1
        %s320 = scalar_lea.vmem %s1, %s319
        %p321 = pneg %p98
        %p322 = pneg %p95
        %p323 = scmp.lt.s32.totalorder %s30, 1
        %s324 = scalar_select %p323, %s30, 1
        %s325 = scalar_lea.vmem %s2, %s324
        %p326 = pneg %p124
        %p327 = pneg %p121
        %p328 = pneg %p145
        %p329 = pneg %p142
        %p330 = pneg %p166
        %p331 = pneg %p163
        %p332 = pneg %p187
        %p333 = pneg %p184
        %p334 = pneg %p219
        %p335 = pneg %p216
        %s336 = sand.u32 %s206, 1
        %s337 = scalar_lea.sflag [#allocation9], %s336
        %s338 = sand.u32 %s206, 1
        %s339 = smul.addr %s338, 8
        %s340 = scalar_lea.vmem [#allocation12], %s339
        %s341 = ssub.s32 1, %s29
        %s342 = smul.u32 %s341, %s30
        %s343 = smul.u32 %s341, %s31
        %p344 = scmp.lt.s32.totalorder %s30, 1
        %s345 = scalar_select %p344, %s30, 1
        %s346 = scalar_lea.vmem %s1, %s345
        %p347 = scmp.lt.s32.totalorder %s30, 1
        %s348 = scalar_select %p347, %s30, 1
        %s349 = scalar_lea.vmem %s2, %s348
        %s350 = smul.u32 %s29, %s30
        %s351 = smul.u32 %s29, %s31
        %s353 = sadd.s32 %s30, %s31
        %p354 = scmp.eq.s32.totalorder %s29, 0
        // Predicated region
        $region53: #{tpu_custom_call.1} parent=43 // pred_check
          %p355 = pneg %p354
        $region54: #{tpu_custom_call.1} parent=43 // pred_check_branch
          %357 = sbr.rel (%p355) target = $region56
        $region55: #{tpu_custom_call.1} parent=43 // pred_region
          %p358 = scmp.eq.s32.totalorder %s30, 0
          %p359 = scmp.eq.s32.totalorder %s31, 0
          %p360 = pnand %p358, %p359
          %p361 = pneg %p360
          // Predicated region
          $region57: #{tpu_custom_call.1} parent=55 // pred_check
            _
          $region58: #{tpu_custom_call.1} parent=55 // pred_check_branch
            %363 = sbr.rel (%p360) target = $region60
          $region59: #{tpu_custom_call.1} parent=55 // pred_region
            %364 = vst [vmem:[#allocation4] sm:$0x1] 0.0
            %365 = vst [vmem:[#allocation5] sm:$0x1] 0.0
          $region60: #{tpu_custom_call.1} parent=55 // pred_fallthru
            _
          %v366 = vld [vmem:[%s302] sm:$0xff]
          %v367 = vpack.c.bf16 %v366, %v366
          %v368 = vld [vmem:[#allocation10] sm:$0xf]
          %v369 = vld [vmem:[#allocation10 + $0x4] sm:$0xf]
          %v370 = vld [vmem:[#allocation10 + $0x8] sm:$0xf]
          %v371 = vld [vmem:[#allocation10 + $0xc] sm:$0xf]
          %v372 = vld [vmem:[#allocation10 + $0x10] sm:$0xf]
          %v373 = vld [vmem:[#allocation10 + $0x14] sm:$0xf]
          %v374 = vld [vmem:[#allocation10 + $0x18] sm:$0xf]
          %v375 = vld [vmem:[#allocation10 + $0x1c] sm:$0xf]
          %v376 = vld [vmem:[#allocation10 + $0x20] sm:$0xf]
          %v377 = vld [vmem:[#allocation10 + $0x24] sm:$0xf]
          %v378 = vld [vmem:[#allocation10 + $0x28] sm:$0xf]
          %v379 = vld [vmem:[#allocation10 + $0x2c] sm:$0xf]
          %v380 = vld [vmem:[#allocation10 + $0x30] sm:$0xf]
          %v381 = vld [vmem:[#allocation10 + $0x34] sm:$0xf]
          %v382 = vld [vmem:[#allocation10 + $0x38] sm:$0xf]
          %v383 = vld [vmem:[#allocation10 + $0x3c] sm:$0xf]
          %v384 = vld [vmem:[%s346] sm:$0x1]
          %v386 = vlaneseq
          %v387 = vshrl.u32 %v386, 7
          %v388 = vsub.s32 0, %v387
          %v389 = vrot.slane %v384, %v388
          %v407 = vunpack.c.l.b16 %v368
          %v408 = vunpack.c.l.b16 %v369
          %v409 = vunpack.c.l.b16 %v370
          %v410 = vunpack.c.l.b16 %v371
          %v411 = vunpack.c.l.b16 %v372
          %v412 = vunpack.c.l.b16 %v373
          %v413 = vunpack.c.l.b16 %v374
          %v414 = vunpack.c.l.b16 %v375
          %v415 = vunpack.c.l.b16 %v376
          %v416 = vunpack.c.l.b16 %v377
          %v417 = vunpack.c.l.b16 %v378
          %v418 = vunpack.c.l.b16 %v379
          %v419 = vunpack.c.l.b16 %v380
          %v420 = vunpack.c.l.b16 %v381
          %v421 = vunpack.c.l.b16 %v382
          %v422 = vunpack.c.l.b16 %v383
          %v423 = vpack.c.b16 %v408, %v407
          %v424 = vpack.c.b16 %v410, %v409
          %v425 = vpack.c.b16 %v412, %v411
          %v426 = vpack.c.b16 %v414, %v413
          %v427 = vpack.c.b16 %v416, %v415
          %v428 = vpack.c.b16 %v418, %v417
          %v429 = vpack.c.b16 %v420, %v419
          %v430 = vpack.c.b16 %v422, %v421
          %439 = vmatprep.subr.bf16.mxu0 0
          %440 = vmatpush1.bf16.msra.mxu0 %v423
          %441 = vmatprep.subr.bf16.mxu0 0
          %442 = vmatpush1.bf16.msra.mxu0 %v424
          %443 = vmatprep.subr.bf16.mxu0 0
          %444 = vmatpush1.bf16.msra.mxu0 %v425
          %445 = vmatprep.subr.bf16.mxu0 0
          %446 = vmatpush1.bf16.msra.mxu0 %v426
          %447 = vmatprep.subr.bf16.mxu0 0
          %448 = vmatpush1.bf16.msra.mxu0 %v427
          %449 = vmatprep.subr.bf16.mxu0 0
          %450 = vmatpush1.bf16.msra.mxu0 %v428
          %451 = vmatprep.subr.bf16.mxu0 0
          %452 = vmatpush1.bf16.msra.mxu0 %v429
          %453 = vmatprep.subr.bf16.mxu0 0
          %454 = vmatpush1.bf16.msra.mxu0 %v430
          %455 = vmatprep.subr.bf16.mxu0 0
          %456 = vmatpush1.bf16.msra.mxu0 0
          %457 = vmatprep.subr.bf16.mxu0 0
          %458 = vmatpush1.bf16.msra.mxu0 0
          %459 = vmatprep.subr.bf16.mxu0 0
          %460 = vmatpush1.bf16.msra.mxu0 0
          %461 = vmatprep.subr.bf16.mxu0 0
          %462 = vmatpush1.bf16.msra.mxu0 0
          %463 = vmatprep.subr.bf16.mxu0 0
          %464 = vmatpush1.bf16.msra.mxu0 0
          %465 = vmatprep.subr.bf16.mxu0 0
          %466 = vmatpush1.bf16.msra.mxu0 0
          %467 = vmatprep.subr.bf16.mxu0 0
          %468 = vmatpush1.bf16.msra.mxu0 0
          %469 = vmatprep.subr.bf16.mxu0 0
          %470 = vmatpush1.bf16.msra.mxu0 0
          %471 = vmatprep.mubr.bf16.mxu0 0
          %472 = vmatmul.mubr.bf16.gmra.mrb[0].mxu0 %v367
          %v473 = vpop.f32.mrb[0].mxu0
          %v474 = vadd.f32 %v389, %v473
          %v475 = vpop.f32.mrb[0].mxu0
          %v476 = vpop.f32.mrb[0].mxu0
          %v477 = vpop.f32.mrb[0].mxu0
          %478 = vdwg.mxu0
          %v479 = vmax.f32 %v474, 0.0
          %v480 = vld [vmem:[%s349] sm:$0x1]
          %v482 = vlaneseq
          %v483 = vshrl.u32 %v482, 7
          %v484 = vsub.s32 0, %v483
          %v485 = vrot.slane %v480, %v484
          %v487 = vmul.f32 %v479, %v485
          %s488 = smul.u32 %s353, 8
          %s489 = scalar_lea.vmem [#allocation2], %s488
          %490 = vst [vmem:[%s489] sm:$0xff] %v487
          %s491 = scalar_lea.vmem [#allocation3], %s488
          %492 = vst [vmem:[%s491] sm:$0xff] %v366
          %v493 = vld [vmem:[#allocation4] sm:$0x1]
          %v494 = vmul.f32 %v366, %v366
          %v495 = vrot.slane %v494, 4
          %v496 = vadd.f32 %v494, %v495
          %v497 = vrot.slane %v496, 2
          %v498 = vadd.f32 %v496, %v497
          %v499 = vrot.slane %v498, 1
          %v500 = vadd.f32 %v498, %v499
          %v501 = vadd.f32 %v493, %v500
          %502 = vst [vmem:[#allocation4] sm:$0x1] %v501
          %v503 = vld [vmem:[#allocation5] sm:$0x1]
          %v504 = vmul.f32 %v487, %v487
          %v505 = vrot.slane %v504, 4
          %v506 = vadd.f32 %v504, %v505
          %v507 = vrot.slane %v506, 2
          %v508 = vadd.f32 %v506, %v507
          %v509 = vrot.slane %v508, 1
          %v510 = vadd.f32 %v508, %v509
          %v511 = vadd.f32 %v503, %v510
          %512 = vst [vmem:[#allocation5] sm:$0x1] %v511
        $region56: #{tpu_custom_call.1} parent=43 // pred_fallthru
          _
        %p513 = scmp.eq.s32.totalorder %s29, 1
        // Predicated region
        $region61: #{tpu_custom_call.1} parent=43 // pred_check
          %p514 = pneg %p513
        $region62: #{tpu_custom_call.1} parent=43 // pred_check_branch
          %516 = sbr.rel (%p514) target = $region64
        $region63: #{tpu_custom_call.1} parent=43 // pred_region
          %p517 = scmp.eq.s32.totalorder %s30, 0
          %p518 = scmp.eq.s32.totalorder %s31, 0
          %p519 = pnand %p517, %p518
          %p520 = pneg %p519
          // Predicated region
          $region65: #{tpu_custom_call.1} parent=63 // pred_check
            _
          $region66: #{tpu_custom_call.1} parent=63 // pred_check_branch
            %522 = sbr.rel (%p519) target = $region68
          $region67: #{tpu_custom_call.1} parent=63 // pred_region
            %v523 = vld [vmem:[#allocation4] sm:$0x1]
            %vm524 = vcmask 1040384
            %v525 = vsel %vm524, %v523, 0.0
            %526 = vadd.xlane.f32.xlu0 %v525
            %v527 = vpop.xlane.xlu0 %526
            %v528 = vld [vmem:[#allocation5] sm:$0x1]
            %v529 = vsel %vm524, %v528, 0.0
            %530 = vadd.xlane.f32.xlu0 %v529
            %v531 = vpop.xlane.xlu0 %530
            %v532 = vrsqrt.pop %v527
            %v533 = vmul.f32 %v527, %v532
            %vm534 = vcmp.eq.f32.partialorder %v527, inf
            %v535 = vsel %vm534, %v527, %v533
            %vm536 = vcmp.eq.f32.partialorder %v527, 0.0
            %v537 = vand.u32 %v527, 2147483648
            %v538 = vsel %vm536, %v537, %v535
            %v539 = vmax.f32 %v531, 1e-30
            %v540 = vrsqrt.pop %v539
            %v541 = vmul.f32 %v539, %v540
            %vm542 = vcmp.eq.f32.partialorder %v539, inf
            %v543 = vsel %vm542, %v539, %v541
            %vm544 = vcmp.eq.f32.partialorder %v539, 0.0
            %v545 = vand.u32 %v539, 2147483648
            %v546 = vsel %vm544, %v545, %v543
            %v547 = vrcp.pop %v546
            %v548 = vmul.f32 %v538, %v547
            %v549 = vmul.f32 %v548, 0.001
            %v550 = vmin.f32 %v549, 1.0
            %vm551 = vcmask 0
            %552 = vst.msk [vmem:[#allocation6] sm:$0x1] %vm551, %v550
          $region68: #{tpu_custom_call.1} parent=63 // pred_fallthru
            _
          %v553 = vld [vmem:[#allocation6] sm:$0x1]
          %s554 = smul.u32 %s353, 8
          %s555 = scalar_lea.vmem [#allocation2], %s554
          %v556 = vld [vmem:[%s555] sm:$0xff]
          %v558 = vlaneseq
          %v559 = vshrl.u32 %v558, 7
          %v560 = vsub.s32 0, %v559
          %v561 = vrot.slane %v553, %v560
          %562 = vset.pattern.permute.xlu0 0
          %563 = vperm.xlu0 %562, %v561
          %v564 = vpop.permute.xlu0 %563
          %v566 = vmul.f32 %v564, %v556
          %s567 = scalar_lea.vmem [#allocation3], %s554
          %v568 = vld [vmem:[%s567] sm:$0xff]
          %v569 = vadd.f32 %v566, %v568
          %570 = vadd.xlane.f32.xlu0 %v569
          %v571 = vpop.xlane.xlu0 %570
          %v572 = vrcp.pop 128.0
          %v573 = vmul.f32 %v571, %v572
          %v574 = vmul.f32 %v569, %v569
          %575 = vadd.xlane.f32.xlu0 %v574
          %v576 = vpop.xlane.xlu0 %575
          %v577 = vmul.f32 %v576, %v572
          %v578 = vmul.f32 %v573, %v573
          %v579 = vsub.f32 %v577, %v578
          %v580 = vadd.f32 %v579, 1e-05
          %v581 = vrsqrt.pop %v580
          %v582 = vsub.f32 %v569, %v573
          %v583 = vmul.f32 %v582, %v581
          %v584 = vld [vmem:[%s4] sm:$0x1]
          %v586 = vlaneseq
          %v587 = vshrl.u32 %v586, 7
          %v588 = vsub.s32 0, %v587
          %v589 = vrot.slane %v584, %v588
          %v591 = vmul.f32 %v583, %v589
          %v592 = vld [vmem:[%s5] sm:$0x1]
          %v594 = vlaneseq
          %v595 = vshrl.u32 %v594, 7
          %v596 = vsub.s32 0, %v595
          %v597 = vrot.slane %v592, %v596
          %v599 = vadd.f32 %v591, %v597
          %600 = vst [vmem:[%s340] sm:$0xff] %v599
        $region64: #{tpu_custom_call.1} parent=43 // pred_fallthru
          _
        %s601 = sand.u32 %s206, 1
        %s602 = scalar_lea.sflag [#allocation9], %s601
        %s603 = sand.u32 %s206, 1
        %s604 = smul.addr %s603, 8
        %s605 = scalar_lea.vmem [#allocation12], %s604
        // Predicated region
        $region69: #{tpu_custom_call.1} parent=43 // pred_check
          %p606 = pneg %p216
        $region70: #{tpu_custom_call.1} parent=43 // pred_check_branch
          %608 = sbr.rel (%p606) target = $region72
        $region71: #{tpu_custom_call.1} parent=43 // pred_region
          %s609 = smul.u32 %s29, %s30
          %s610 = smul.u32 %s29, %s31
          %s612 = ssub.s32 128, 128
          %613 = vsyncadd %s602, %s612
          %s614 = sadd.s32 %s610, %s609
          %s615 = smul.addr %s614, 128
          %s616 = scalar_lea.hbm %s6, %s615
          %s618 = sshll.u32 %s605, 4
          %s619 = int_to_ptr.vmem [resolvable:$true] %s618
          %621 = dma.vmem_to_hbm [thread:$0]  %s619, 128, %s616, %s602
        $region72: #{tpu_custom_call.1} parent=43 // pred_fallthru
          _
      $region44: #{tpu_custom_call.1} parent=5 // pred_fallthru
        _
      %p622 = scmp.le.s32.totalorder 2, %s19
      // Predicated region
      $region73: #{tpu_custom_call.1} parent=5 // pred_check
        %p623 = pneg %p622
      $region74: #{tpu_custom_call.1} parent=5 // pred_check_branch
        %625 = sbr.rel (%p623) target = $region76
      $region75: #{tpu_custom_call.1} parent=5 // pred_region
        %s626 = ssub.s32 %s19, 2
        // Predicated region
        $region77: #{tpu_custom_call.1} parent=75 // pred_check
          %p627 = pneg %p222
        $region78: #{tpu_custom_call.1} parent=75 // pred_check_branch
          %629 = sbr.rel (%p627) target = $region80
        $region79: #{tpu_custom_call.1} parent=75 // pred_region
          %s630 = sand.u32 %s207, 1
          %s631 = scalar_lea.sflag [#allocation9], %s630
          %s632 = sand.u32 %s207, 1
          %s633 = smul.addr %s632, 8
          %s634 = scalar_lea.vmem [#allocation12], %s633
          %635 = dma.done %s631, 128
        $region80: #{tpu_custom_call.1} parent=75 // pred_fallthru
          _
      $region76: #{tpu_custom_call.1} parent=5 // pred_fallthru
        _
    $region6: #{tpu_custom_call.1} parent=1 // loop_footer
      %s23 = sadd.s32 1, %s19
    $region7: #{tpu_custom_call.1} parent=1 // loop_footer_branch
      %18 = sbr.rel target = $region3
    $region8: #{tpu_custom_call.1} parent=1 // loop_exit
      _
    %636 = vsyncpa [#allocation8], 1
    %s637 = scalar_lea.sflag [#allocation8], 1
    %638 = vsyncpa %s637, 1
    %639 = vsyncpa [#allocation11], 1
    %640 = vsyncpa [#allocation9], 1
    %s641 = scalar_lea.sflag [#allocation9], 1
    %642 = vsyncpa %s641, 1

</llo_original>
